<compile_context>
chip_gen: v7x
topology: tpu7x:2x2x1
jax: 0.10.0
libtpu: 0.0.40
codegen_flags: <defaults>
</compile_context>

<pallas_src>
import math

import numpy as np
import jax
import jax.numpy as jnp
from jax.experimental import pallas as pl
from jax.experimental.pallas import tpu as pltpu


def _time_encoder_kernel(t_ref, e_ref, b_ref, o_ref):
    # t_ref: (tm, k)      packed timestamps (k logical rows per slab row)
    # e_ref: (k, W)       block-diagonal weight rows, W = k * dim
    # b_ref: (1, W)       bias tiled k times
    # o_ref: (tm, W)      lane-dense output slab
    k = t_ref.shape[1]
    t = t_ref[...]
    e = e_ref[...]
    # Exact expansion: for lane c, only j == c // dim contributes (others are
    # multiplied by an exact 0.0), so acc == t[row] * w[c % dim] bit-for-bit.
    acc = t[:, 0:1] * e[0:1, :]
    for j in range(1, k):  # k <= 16, statically unrolled VALU ops
        acc = acc + t[:, j : j + 1] * e[j : j + 1, :]
    # Bias add + cosine on full 128-lane vregs; unmasked lane-dense stores.
    o_ref[...] = jnp.cos(acc + b_ref[...])


def time_encoder(t, weight, bias, *, tile_rows=8192, max_pack=16):
    """Pallas implementation of TimeEncoder.forward.

    Args:
      t:      float32 array of arbitrary shape (flattened like torch's
              t.reshape(-1, 1)).
      weight: float32 (dim, 1) -- nn.Linear(1, dim).weight
      bias:   float32 (dim,)   -- nn.Linear(1, dim).bias
      tile_rows: packed-row tile size (rows of the (m, k*dim) slab per step).
      max_pack:  cap on the packing factor k (VALU expansion terms per lane).
    Returns:
      float32 (N, dim) with N = t.size.
    """
    dim = int(weight.shape[0])
    w = weight.reshape(-1).astype(jnp.float32)   # (dim,)
    b = bias.reshape(-1).astype(jnp.float32)     # (dim,)
    t_flat = t.reshape(-1).astype(jnp.float32)
    n = t_flat.shape[0]

    # Packing factor: smallest k with (k * dim) % 128 == 0, capped so the
    # exact per-lane expansion stays cheap; fall back to k=1 otherwise
    # (odd dims then take masked partial stores -- still correct).
    k = 128 // math.gcd(dim, 128)
    if k > max_pack:
        k = 1
    W = k * dim

    # Pad t (tiny) up to a multiple of k so it reshapes to (m, k).
    m = -(-n // k)
    n_pad = m * k
    if n_pad != n:
        t_flat = jnp.pad(t_flat, (0, n_pad - n))
    t_packed = t_flat.reshape(m, k)

    # Block-diagonal weight rows: E[j, i*dim + d] = w[d] if i == j else 0.
    eye = jnp.eye(k, dtype=jnp.float32)                       # (k, k)
    e_mat = (eye[:, :, None] * w[None, None, :]).reshape(k, W)
    b_row = jnp.tile(b, k).reshape(1, W)

    # Row-tile selection: big tiles amortize the ~0.35us per-step overhead.
    # Cap each output buffer at ~4 MiB so the double-buffered output (8 MiB)
    # plus tiny t / weight / bias blocks fits comfortably inside the scoped
    # VMEM default on every chip (v5e 16 MiB, v6e 32 MiB, v7x 32/64 MiB).
    tile_rows = max(8, (tile_rows // 8) * 8)
    vmem_cap_rows = max(8, ((4 * 1024 * 1024) // (4 * W)) // 8 * 8)
    tm = min(tile_rows, vmem_cap_rows, m)   # tm is a multiple of 8 or == m

    grid = (pl.cdiv(m, tm),)                # edge block masked by Pallas

    out_packed = pl.pallas_call(
        _time_encoder_kernel,
        out_shape=jax.ShapeDtypeStruct((m, W), jnp.float32),
        grid_spec=pltpu.PrefetchScalarGridSpec(
            num_scalar_prefetch=0,
            grid=grid,
            in_specs=[
                pl.BlockSpec((tm, k), lambda i: (i, 0)),   # packed t rows
                pl.BlockSpec((k, W), lambda i: (0, 0)),    # weights (resident)
                pl.BlockSpec((1, W), lambda i: (0, 0)),    # bias    (resident)
            ],
            out_specs=pl.BlockSpec((tm, W), lambda i: (i, 0)),
        ),
        compiler_params=pltpu.CompilerParams(
            dimension_semantics=("parallel",)),
    )(t_packed, e_mat, b_row)

    # (m, k*dim) -> (n_pad, dim) is a free row-major reshape.
    out = out_packed.reshape(n_pad, dim)
    if n_pad != n:
        out = out[:n]
    return out


def make_time_encoder_params(dim):
    """Deterministic init mirroring TimeEncoder.__init__."""
    w = (1.0 / 10 ** np.linspace(0, 9, dim, dtype=np.float32)).reshape(dim, 1)
    b = np.zeros((dim,), dtype=np.float32)
    return jnp.asarray(w), jnp.asarray(b)


if __name__ == "__main__":
    # Case 1: dim=32 (k=4 packing), tiny batch -> single block, no pipelining.
    dim = 32
    weight, bias = make_time_encoder_params(dim)

    def ref_fn(tt, wgt, bs):
        return jnp.cos(tt.reshape(-1, 1) @ wgt.T + bs[None, :])

    n = 16
    t = jax.random.uniform(jax.random.PRNGKey(0), (n,), dtype=jnp.float32) * 100.0
    out = jax.block_until_ready(time_encoder(t, weight, bias))
    assert out.shape == (n, dim)
    np.testing.assert_allclose(np.asarray(out), np.asarray(ref_fn(t, weight, bias)),
                               rtol=1e-5, atol=1e-5)

    # Case 2: multi-step grid with a non-divisible edge block and row padding.
    n2 = 301
    t2 = jax.random.uniform(jax.random.PRNGKey(1), (n2,), dtype=jnp.float32) * 100.0
    out2 = jax.block_until_ready(time_encoder(t2, weight, bias, tile_rows=16))
    assert out2.shape == (n2, dim)
    np.testing.assert_allclose(np.asarray(out2), np.asarray(ref_fn(t2, weight, bias)),
                               rtol=1e-5, atol=1e-5)

    # Case 3: dim=100 (does not pack into 128 lanes cheaply -> k=1 fallback,
    # masked partial stores, still correct).
    dim3 = 100
    weight3, bias3 = make_time_encoder_params(dim3)
    n3 = 37
    t3 = jax.random.uniform(jax.random.PRNGKey(2), (n3,), dtype=jnp.float32) * 100.0
    out3 = jax.block_until_ready(time_encoder(t3, weight3, bias3))
    assert out3.shape == (n3, dim3)
    np.testing.assert_allclose(np.asarray(out3), np.asarray(ref_fn(t3, weight3, bias3)),
                               rtol=1e-5, atol=1e-5)

    print("KERNEL_OK")
</pallas_src>

<mosaic_0001>
module attributes {stable_mosaic.version = 11 : i64} {
  func.func @_time_encoder_kernel(%arg0: i32, %arg1: memref<4x4xf32, #tpu.memory_space<vmem>>, %arg2: memref<4x128xf32, #tpu.memory_space<vmem>>, %arg3: memref<1x128xf32, #tpu.memory_space<vmem>>, %arg4: memref<4x128xf32, #tpu.memory_space<vmem>>) attributes {dimension_semantics = [#tpu.dimension_semantics<parallel>], iteration_bounds = array<i64: 1>, scalar_prefetch = 0 : i64, scratch_operands = 0 : i64, tpu.core_type = #tpu.core_type<tc>, window_params = [{transform_indices = @transform_0, window_bounds = array<i64: 4, 4>}, {pipeline_mode = #tpu.pipeline_mode<synchronous>, transform_indices = @transform_1, window_bounds = array<i64: 4, 128>}, {pipeline_mode = #tpu.pipeline_mode<synchronous>, transform_indices = @transform_2, window_bounds = array<i64: 1, 128>}, {transform_indices = @transform_3, window_bounds = array<i64: 4, 128>}]} {
    %c0 = arith.constant 0 : index
    %c0_0 = arith.constant 0 : index
    %0 = vector.load %arg1[%c0, %c0_0] : memref<4x4xf32, #tpu.memory_space<vmem>>, vector<4x4xf32>
    %c0_1 = arith.constant 0 : index
    %c0_2 = arith.constant 0 : index
    %1 = vector.load %arg2[%c0_1, %c0_2] : memref<4x128xf32, #tpu.memory_space<vmem>>, vector<4x128xf32>
    %2 = vector.extract_strided_slice %0 {offsets = [0, 0], sizes = [4, 1], strides = [1, 1]} : vector<4x4xf32> to vector<4x1xf32>
    %3 = vector.extract_strided_slice %1 {offsets = [0, 0], sizes = [1, 128], strides = [1, 1]} : vector<4x128xf32> to vector<1x128xf32>
    %4 = vector.broadcast %2 : vector<4x1xf32> to vector<4x128xf32>
    %5 = vector.broadcast %3 : vector<1x128xf32> to vector<4x128xf32>
    %6 = arith.mulf %4, %5 : vector<4x128xf32>
    %7 = vector.extract_strided_slice %0 {offsets = [0, 1], sizes = [4, 1], strides = [1, 1]} : vector<4x4xf32> to vector<4x1xf32>
    %8 = vector.extract_strided_slice %1 {offsets = [1, 0], sizes = [1, 128], strides = [1, 1]} : vector<4x128xf32> to vector<1x128xf32>
    %9 = vector.broadcast %7 : vector<4x1xf32> to vector<4x128xf32>
    %10 = vector.broadcast %8 : vector<1x128xf32> to vector<4x128xf32>
    %11 = arith.mulf %9, %10 : vector<4x128xf32>
    %12 = arith.addf %6, %11 : vector<4x128xf32>
    %13 = vector.extract_strided_slice %0 {offsets = [0, 2], sizes = [4, 1], strides = [1, 1]} : vector<4x4xf32> to vector<4x1xf32>
    %14 = vector.extract_strided_slice %1 {offsets = [2, 0], sizes = [1, 128], strides = [1, 1]} : vector<4x128xf32> to vector<1x128xf32>
    %15 = vector.broadcast %13 : vector<4x1xf32> to vector<4x128xf32>
    %16 = vector.broadcast %14 : vector<1x128xf32> to vector<4x128xf32>
    %17 = arith.mulf %15, %16 : vector<4x128xf32>
    %18 = arith.addf %12, %17 : vector<4x128xf32>
    %19 = vector.extract_strided_slice %0 {offsets = [0, 3], sizes = [4, 1], strides = [1, 1]} : vector<4x4xf32> to vector<4x1xf32>
    %20 = vector.extract_strided_slice %1 {offsets = [3, 0], sizes = [1, 128], strides = [1, 1]} : vector<4x128xf32> to vector<1x128xf32>
    %21 = vector.broadcast %19 : vector<4x1xf32> to vector<4x128xf32>
    %22 = vector.broadcast %20 : vector<1x128xf32> to vector<4x128xf32>
    %23 = arith.mulf %21, %22 : vector<4x128xf32>
    %24 = arith.addf %18, %23 : vector<4x128xf32>
    %c0_3 = arith.constant 0 : index
    %c0_4 = arith.constant 0 : index
    %25 = vector.load %arg3[%c0_3, %c0_4] : memref<1x128xf32, #tpu.memory_space<vmem>>, vector<1x128xf32>
    %26 = vector.broadcast %25 : vector<1x128xf32> to vector<4x128xf32>
    %27 = arith.addf %24, %26 : vector<4x128xf32>
    %28 = math.cos %27 : vector<4x128xf32>
    %c0_5 = arith.constant 0 : index
    %c0_6 = arith.constant 0 : index
    %29 = vector.load %arg4[%c0_5, %c0_6] : memref<4x128xf32, #tpu.memory_space<vmem>>, vector<4x128xf32>
    tpu.vector_store %arg4[%c0_5, %c0_6], %28 {strides = array<i32>} : memref<4x128xf32, #tpu.memory_space<vmem>>, vector<4x128xf32>,
    return
  }
  func.func @transform_0(%arg0: i32) -> (i32, i32) {
    %c0_i32 = arith.constant 0 : i32
    %c0_i32_0 = arith.constant 0 : i32
    return %arg0, %c0_i32 : i32, i32
  }
  func.func @transform_1(%arg0: i32) -> (i32, i32) {
    %c0_i32 = arith.constant 0 : i32
    %c0_i32_0 = arith.constant 0 : i32
    %c0_i32_1 = arith.constant 0 : i32
    return %c0_i32, %c0_i32_0 : i32, i32
  }
  func.func @transform_2(%arg0: i32) -> (i32, i32) {
    %c0_i32 = arith.constant 0 : i32
    %c0_i32_0 = arith.constant 0 : i32
    %c0_i32_1 = arith.constant 0 : i32
    return %c0_i32, %c0_i32_0 : i32, i32
  }
  func.func @transform_3(%arg0: i32) -> (i32, i32) {
    %c0_i32 = arith.constant 0 : i32
    %c0_i32_0 = arith.constant 0 : i32
    return %arg0, %c0_i32 : i32, i32
  }
}

</mosaic_0001>

<llo_original>
// kernel: tpu_custom_call.1
$region0: #{tpu_custom_call.1}
  #allocation0 [shape = 'u32[]', space=smem, size = 0x4, offset = 0x4, fixed_abs, tag = 'smem constant byte address 0x4 - core index']
  #allocation1 [shape = 'u32[144,128]{1,0:T(1,128)}', space=vmem, size = 0x12000, scoped, tag = 'internal scratch']
  %s0 = inlined_call_operand.hbm [shape: f32[4,4], index: 0, kind: input, shape index: {}]
  %s1 = inlined_call_operand.hbm [shape: f32[4,128], index: 1, kind: input, shape index: {}]
  %s2 = inlined_call_operand.vmem [shape: f32[1,128], index: 2, kind: input, shape index: {}]
  %s3 = inlined_call_operand.hbm [shape: f32[4,128], index: 3, kind: output, shape index: {}]
  %s4 = sld [smem:[#allocation0]]
  $region30: #{tpu_custom_call.1} parent=0
    _
  %s6 = ssub.s32 1, %s4
  %s7 = scalar_select 0, %s6, %s4
  $region1: #{tpu_custom_call.1} parent=0
    #allocation2 [shape = 'u8[2048]{0}', space=vmem, size = 0x800, scoped, tag = 'input window, operand 0, single buffered']
    #allocation3 [shape = 's32[1]{0}', space=sflag, size = 0x4, scoped, tag = 'scoped memory for tpu_custom_call.1']
    #allocation4 [shape = 's32[1]{0}', space=sflag, size = 0x4, scoped, tag = 'scoped memory for tpu_custom_call.1']
    #allocation5 [shape = 'u8[2048]{0}', space=vmem, size = 0x800, scoped, tag = 'input window, operand 1, single buffered']
    #allocation6 [shape = 's32[1]{0}', space=sflag, size = 0x4, scoped, tag = 'scoped memory for tpu_custom_call.1']
    #allocation7 [shape = 'u8[2048]{0}', space=vmem, size = 0x800, scoped, tag = 'output window, operand 0, single buffered']
    %8 = vsyncpa [#allocation3], 0
    %9 = vsyncpa [#allocation6], 0
    %10 = vsyncpa [#allocation4], 0
    // Predicated region
    $region2: #{tpu_custom_call.1} parent=1 // pred_check
      _
    $region3: #{tpu_custom_call.1} parent=1 // pred_check_branch
      %12 = sbr.rel (0) target = $region5
    $region4: #{tpu_custom_call.1} parent=1 // pred_region
      %s14 = ssub.s32 64, 64
      %15 = vsyncadd [#allocation3], %s14
      %s17 = sshll.u32 [#allocation2], 4
      %s18 = int_to_ptr.vmem [resolvable:$true] %s17
      %20 = dma.hbm_to_vmem [thread:$0]  %s0, 64, %s18, [#allocation3]
    $region5: #{tpu_custom_call.1} parent=1 // pred_fallthru
      _
    // Predicated region
    $region6: #{tpu_custom_call.1} parent=1 // pred_check
      _
    $region7: #{tpu_custom_call.1} parent=1 // pred_check_branch
      %22 = sbr.rel (0) target = $region9
    $region8: #{tpu_custom_call.1} parent=1 // pred_region
      %s24 = ssub.s32 64, 64
      %25 = vsyncadd [#allocation6], %s24
      %s27 = sshll.u32 [#allocation5], 4
      %s28 = int_to_ptr.vmem [resolvable:$true] %s27
      %30 = dma.hbm_to_vmem [thread:$0]  %s1, 64, %s28, [#allocation6]
    $region9: #{tpu_custom_call.1} parent=1 // pred_fallthru
      _
    // Predicated region
    $region10: #{tpu_custom_call.1} parent=1 // pred_check
      _
    $region11: #{tpu_custom_call.1} parent=1 // pred_check_branch
      %32 = sbr.rel (0) target = $region13
    $region12: #{tpu_custom_call.1} parent=1 // pred_region
      _
    $region13: #{tpu_custom_call.1} parent=1 // pred_fallthru
      _
    // Predicated region
    $region14: #{tpu_custom_call.1} parent=1 // pred_check
      _
    $region15: #{tpu_custom_call.1} parent=1 // pred_check_branch
      %34 = sbr.rel (0) target = $region17
    $region16: #{tpu_custom_call.1} parent=1 // pred_region
      %35 = dma.done [#allocation3], 64
    $region17: #{tpu_custom_call.1} parent=1 // pred_fallthru
      _
    // Predicated region
    $region18: #{tpu_custom_call.1} parent=1 // pred_check
      _
    $region19: #{tpu_custom_call.1} parent=1 // pred_check_branch
      %37 = sbr.rel (0) target = $region21
    $region20: #{tpu_custom_call.1} parent=1 // pred_region
      %38 = dma.done [#allocation6], 64
    $region21: #{tpu_custom_call.1} parent=1 // pred_fallthru
      _
    %v39 = vld [vmem:[#allocation2] sm:$0xf]
    %v40 = vld [vmem:[#allocation5] sm:$0xf]
    %42 = vset.pattern.permute.xlu0 0
    %43 = vperm.xlu0 %42, %v39
    %v44 = vpop.permute.xlu0 %43
    %v46 = vlaneseq
    %v47 = vshrl.u32 %v46, 7
    %v48 = vsub.s32 0, %v47
    %v49 = vrot.slane %v40, %v48
    %v50 = vmul.f32 %v44, %v49
    %51 = vset.pattern.permute.xlu0 1
    %52 = vperm.xlu0 %51, %v39
    %v53 = vpop.permute.xlu0 %52
    %v55 = vlaneseq
    %v56 = vshrl.u32 %v55, 7
    %v57 = vsub.s32 1, %v56
    %v58 = vrot.slane %v40, %v57
    %v59 = vmul.f32 %v53, %v58
    %v60 = vadd.f32 %v50, %v59
    %61 = vset.pattern.permute.xlu0 2
    %62 = vperm.xlu0 %61, %v39
    %v63 = vpop.permute.xlu0 %62
    %v65 = vlaneseq
    %v66 = vshrl.u32 %v65, 7
    %v67 = vsub.s32 2, %v66
    %v68 = vrot.slane %v40, %v67
    %v69 = vmul.f32 %v63, %v68
    %v70 = vadd.f32 %v60, %v69
    %71 = vset.pattern.permute.xlu0 3
    %72 = vperm.xlu0 %71, %v39
    %v73 = vpop.permute.xlu0 %72
    %v75 = vlaneseq
    %v76 = vshrl.u32 %v75, 7
    %v77 = vsub.s32 3, %v76
    %v78 = vrot.slane %v40, %v77
    %v79 = vmul.f32 %v73, %v78
    %v80 = vadd.f32 %v70, %v79
    %v81 = vld [vmem:[%s2] sm:$0x1]
    %v83 = vlaneseq
    %v84 = vshrl.u32 %v83, 7
    %v85 = vsub.s32 0, %v84
    %v86 = vrot.slane %v81, %v85
    %v88 = vadd.f32 %v80, %v86
    %v89 = vand.u32 2147483647, %v88
    %vm90 = vcmp.le.f32.partialorder %v89, 0.7853982
    %vm91 = vcmp.lt.s32.totalorder %v88, 0
    %v92 = vand.u32 %v88, 2139095040
    %v93 = vshrl.u32 %v92, 23
    %v94 = vsub.s32 %v93, 127
    %v95 = vand.u32 2147483647, %v88
    %v96 = vand.u32 %v95, 8388607
    %v97 = vor.u32 %v96, 8388608
    %v98 = vsub.s32 0, %v97
    %v99 = vadd.s32 %v94, 1
    %vm100 = vcmp.gt.s32.totalorder %v99, 0
    %v101 = vsel %vm100, %v99, 0
    %v102 = vshrl.u32 %v101, 5
    %v103 = vand.u32 %v101, 31
    %v104 = vsub.s32 32, %v103
    %v105 = vshrl.u32 683565275, %v104
    %v106 = vshll.u32 683565275, %v103
    %v107 = vshrl.u32 2475754826, %v104
    %v108 = vor.u32 %v106, %v107
    %v109 = vshll.u32 2475754826, %v103
    %v110 = vshrl.u32 2131351028, %v104
    %v111 = vor.u32 %v109, %v110
    %v112 = vshll.u32 2131351028, %v103
    %v113 = vshrl.u32 2102212464, %v104
    %v114 = vor.u32 %v112, %v113
    %v115 = vshll.u32 2102212464, %v103
    %v116 = vshrl.u32 920167782, %v104
    %v117 = vor.u32 %v115, %v116
    %v118 = vshll.u32 920167782, %v103
    %v119 = vshrl.u32 1326507024, %v104
    %v120 = vor.u32 %v118, %v119
    %vm121 = vcmp.lt.s32.totalorder %v102, 1
    %vm122 = vcmp.lt.s32.totalorder %v102, 2
    %vm123 = vcmp.lt.s32.totalorder %v102, 3
    %vm124 = vcmp.lt.s32.totalorder %v102, 4
    %v125 = vsel %vm121, %v105, %v108
    %v126 = vsel %vm124, %v114, 2102212464
    %v127 = vsel %vm123, %v111, %v126
    %v128 = vsel %vm122, %v125, %v127
    %v129 = vsel %vm121, %v108, %v111
    %v130 = vsel %vm124, %v117, 920167782
    %v131 = vsel %vm123, %v114, %v130
    %v132 = vsel %vm122, %v129, %v131
    %v133 = vsel %vm121, %v111, %v114
    %v134 = vsel %vm124, %v120, 1326507024
    %v135 = vsel %vm123, %v117, %v134
    %v136 = vsel %vm122, %v133, %v135
    %v137 = vshll.u32 %v97, 8
    %v138 = vmul.u32.u64.compose %v137, %v136
    %v139 = vextract.low.u32 %v138
    %v140 = vextract.high.u32 %v138
    %v141 = vmul.u32.u64.compose %v137, %v132
    %v142 = vextract.low.u32 %v141
    %v143 = vextract.high.u32 %v141
    %v144 = vmul.u32 %v137, %v128
    %v145 = vadd.s32 %v140, %v142
    %vm146 = vc.u32 %v140, %v142
    %v147 = vadd.s32 %v143, 1
    %v148 = vsel %vm146, %v147, %v143
    %v149 = vadd.s32 %v144, %v148
    %v150 = vadd.s32 %v149, 536870912
    %v151 = vshrl.u32 %v150, 30
    %v152 = vshll.u32 %v151, 30
    %v153 = vsub.s32 %v149, %v152
    %vm154 = vcmp.lt.s32.totalorder %v153, 0
    %v155 = vsub.s32 0, %v153
    %v156 = vsel %vm154, %v155, %v153
    %v157 = vclz %v156
    %v158 = vsub.s32 %v157, 2
    %vm159 = vcmp.gt.s32.totalorder 0, %v158
    %v160 = vsel %vm159, 0, %v158
    %v161 = vsub.s32 32, %v160
    %v162 = vshll.u32 %v153, %v160
    %v163 = vshrl.u32 %v145, %v161
    %v164 = vor.u32 %v162, %v163
    %v165 = vsub.s32 4294967266, %v160
    %v166 = vadd.s32 %v165, 127
    %v167 = vshll.u32 %v166, 23
    %v168 = vor.u32 4788187, %v167
    %v169 = vand.u32 2147483647, %v168
    %v171 = vcvt.s32.f32 %v164
    %v172 = vmul.f32 %v171, %v169
    %v173 = vxor.u32 %v172, 2147483648
    %v174 = vsel %vm91, %v173, %v172
    %v175 = vsub.s32 4, %v151
    %v176 = vsel %vm91, %v175, %v151
    %v177 = vsel %vm90, %v88, %v174
    %v178 = vsel %vm90, 0, %v176
    %v179 = vcosq.f32.pop %v177
    %v180 = vsinq.f32.pop %v177
    %vm181 = vweird.f32 %v88
    %v182 = vand.u32 %v178, 3
    %vm183 = vcmp.lt.s32.totalorder %v182, 2
    %vm184 = vcmp.eq.s32.totalorder %v182, 0
    %v185 = vxor.u32 %v180, 2147483648
    %v186 = vsel %vm184, %v179, %v185
    %vm187 = vcmp.eq.s32.totalorder %v182, 2
    %v188 = vxor.u32 %v179, 2147483648
    %v189 = vsel %vm187, %v188, %v180
    %v190 = vsel %vm183, %v186, %v189
    %v191 = vsel %vm181, nan, %v190
    %192 = vst [vmem:[#allocation7] sm:$0xf] %v191
    // Predicated region
    $region22: #{tpu_custom_call.1} parent=1 // pred_check
      _
    $region23: #{tpu_custom_call.1} parent=1 // pred_check_branch
      %194 = sbr.rel (0) target = $region25
    $region24: #{tpu_custom_call.1} parent=1 // pred_region
      %s196 = ssub.s32 64, 64
      %197 = vsyncadd [#allocation4], %s196
      %s199 = sshll.u32 [#allocation7], 4
      %s200 = int_to_ptr.vmem [resolvable:$true] %s199
      %202 = dma.vmem_to_hbm [thread:$0]  %s200, 64, %s3, [#allocation4]
    $region25: #{tpu_custom_call.1} parent=1 // pred_fallthru
      _
    // Predicated region
    $region26: #{tpu_custom_call.1} parent=1 // pred_check
      _
    $region27: #{tpu_custom_call.1} parent=1 // pred_check_branch
      %204 = sbr.rel (0) target = $region29
    $region28: #{tpu_custom_call.1} parent=1 // pred_region
      %205 = dma.done [#allocation4], 64
    $region29: #{tpu_custom_call.1} parent=1 // pred_fallthru
      _
    %206 = vsyncpa [#allocation3], 1
    %207 = vsyncpa [#allocation6], 1
    %208 = vsyncpa [#allocation4], 1

</llo_original>
